<compile_context>
chip_gen: v7x
topology: tpu7x:2x2x1
jax: 0.10.0
libtpu: 0.0.40
codegen_flags: <defaults>
</compile_context>

<pallas_src>
import functools

import jax
import jax.numpy as jnp
from jax.experimental import pallas as pl
from jax.experimental.pallas import tpu as pltpu


def _make_ls_ce_kernel(alpha, n_class, c_pad, total_b, padded_b, tile_b):
    """Per-tile kernel: writes the partial loss sum of its TB rows."""
    inv_c = 1.0 / float(n_class)
    need_class_mask = c_pad > n_class
    need_row_mask = padded_b > total_b

    def kernel(logits_ref, target_ref, out_ref):
        x = logits_ref[...].astype(jnp.float32)          # (TB, C_pad) f32
        t = target_ref[...]                              # (TB, 1) int32
        tb, cp = x.shape

        # log_softmax along the class (lane) axis.  Padded lanes hold -1e30,
        # so they contribute exp() == 0 and never win the max.
        m = jnp.max(x, axis=-1, keepdims=True)           # (TB, 1)
        shifted = x - m
        lse = jnp.log(jnp.sum(jnp.exp(shifted), axis=-1, keepdims=True))
        logprobs = shifted - lse                         # (TB, C_pad)

        classes = jax.lax.broadcasted_iota(jnp.int32, (tb, cp), 1)

        # target term:  sum_c one_hot * logprobs  ==  logprob at the label
        lp_target = jnp.sum(
            jnp.where(classes == t, logprobs, 0.0), axis=-1, keepdims=True)

        # uniform term: sum over *valid* classes only (exclude lane padding)
        if need_class_mask:
            lp_sum = jnp.sum(
                jnp.where(classes < n_class, logprobs, 0.0),
                axis=-1, keepdims=True)
        else:
            lp_sum = jnp.sum(logprobs, axis=-1, keepdims=True)

        per_row = -((1.0 - alpha) * lp_target + (alpha * inv_c) * lp_sum)

        # Mask batch-padding rows out of the partial sum.
        if need_row_mask:
            i = pl.program_id(0)
            rows = jax.lax.broadcasted_iota(jnp.int32, (tb, 1), 0) + i * tile_b
            per_row = jnp.where(rows < total_b, per_row, 0.0)

        tile_sum = jnp.sum(per_row)
        # Lane-dense (1, 8, 128) output block; lane/sublane 0 read outside.
        out_ref[...] = jnp.full(out_ref.shape, tile_sum, dtype=jnp.float32)

    return kernel


def _choose_tile_b(batch, c_pad, itemsize, tile_b=None):
    if tile_b is not None:
        assert tile_b % 8 == 0 and tile_b >= 8
        return tile_b
    per_buffer_budget = 8 * 1024 * 1024          # ~8 MiB per pipeline buffer
    tb = per_buffer_budget // (c_pad * itemsize)
    tb = max(8, min(int(tb), 2048))
    tb = (tb // 8) * 8
    b_pad8 = ((batch + 7) // 8) * 8
    return max(8, min(tb, b_pad8))


@functools.partial(jax.jit, static_argnames=("alpha", "n_class", "tile_b"))
def label_smoothing_cross_entropy(logits, target, alpha=0.1, n_class=10,
                                  tile_b=None):
    """logits: (B, n_class) float (f32 or bf16); target: (B,) int. -> scalar f32."""
    b, c = logits.shape
    assert c == n_class

    itemsize = jnp.dtype(logits.dtype).itemsize
    c_pad = max(128, ((c + 127) // 128) * 128)            # lane-dense class dim
    tb = _choose_tile_b(b, c_pad, itemsize, tile_b)
    num_tiles = pl.cdiv(b, tb)
    b_pad = num_tiles * tb

    # Pad class dim with a very negative value (zero prob mass); pad batch rows
    # with zeros (they are masked out inside the kernel).
    if c_pad > c:
        logits = jnp.pad(logits, ((0, 0), (0, c_pad - c)),
                         constant_values=-1e30)
    if b_pad > b:
        logits = jnp.pad(logits, ((0, b_pad - b), (0, 0)))
    target2d = jnp.pad(target.astype(jnp.int32), (0, b_pad - b)).reshape(b_pad, 1)

    cost = pl.CostEstimate(
        flops=6 * b_pad * c_pad,
        transcendentals=2 * b_pad * c_pad,                 # exp + log
        bytes_accessed=b_pad * c_pad * itemsize + b_pad * 4
                       + num_tiles * 8 * 128 * 4,
    )

    partials = pl.pallas_call(
        _make_ls_ce_kernel(alpha, n_class, c_pad, b, b_pad, tb),
        out_shape=jax.ShapeDtypeStruct((num_tiles, 8, 128), jnp.float32),
        grid=(num_tiles,),
        in_specs=[
            pl.BlockSpec((tb, c_pad), lambda i: (i, 0)),   # logits tile
            pl.BlockSpec((tb, 1), lambda i: (i, 0)),       # targets tile
        ],
        out_specs=pl.BlockSpec((1, 8, 128), lambda i: (i, 0, 0)),
        compiler_params=pltpu.CompilerParams(
            dimension_semantics=("parallel",),             # shard tiles on v7x TCs
            vmem_limit_bytes=32 * 1024 * 1024,
        ),
        cost_estimate=cost,
    )(logits, target2d)

    # Final reduction + mean over the *true* batch size, outside the kernel.
    return jnp.sum(partials[:, 0, 0]) / jnp.float32(b)


def _reference(logits, target, alpha, n_class):
    logprobs = jax.nn.log_softmax(logits.astype(jnp.float32), axis=-1)
    one_hot = jax.nn.one_hot(target, n_class, dtype=jnp.float32)
    smoothed = one_hot * (1.0 - alpha) + alpha / n_class
    return jnp.mean(-jnp.sum(smoothed * logprobs, axis=-1))


if __name__ == "__main__":
    key = jax.random.PRNGKey(0)
    k_logits, k_target, k_logits2, k_target2 = jax.random.split(key, 4)

    ALPHA, N_CLASS = 0.1, 10

    # Case 1: the module's toy shape (single tile).
    B = 8
    logits = jax.random.normal(k_logits, (B, N_CLASS), dtype=jnp.float32)
    target = jax.random.randint(k_target, (B,), 0, N_CLASS, dtype=jnp.int32)
    loss = label_smoothing_cross_entropy(logits, target, alpha=ALPHA,
                                         n_class=N_CLASS)
    loss = jax.block_until_ready(loss)
    ref = _reference(logits, target, ALPHA, N_CLASS)
    assert jnp.allclose(loss, ref, atol=1e-5, rtol=1e-5), (loss, ref)

    # Case 2: multi-tile grid with a ragged last tile (B=20, TB=8 -> 3 tiles,
    # 4 padded rows masked) to exercise the gridded / masked path.
    B2 = 20
    logits2 = jax.random.normal(k_logits2, (B2, N_CLASS), dtype=jnp.float32)
    target2 = jax.random.randint(k_target2, (B2,), 0, N_CLASS, dtype=jnp.int32)
    loss2 = label_smoothing_cross_entropy(logits2, target2, alpha=ALPHA,
                                          n_class=N_CLASS, tile_b=8)
    loss2 = jax.block_until_ready(loss2)
    ref2 = _reference(logits2, target2, ALPHA, N_CLASS)
    assert jnp.allclose(loss2, ref2, atol=1e-5, rtol=1e-5), (loss2, ref2)

    print("KERNEL_OK")
</pallas_src>

<mosaic_0001>
module attributes {stable_mosaic.version = 11 : i64} {
  func.func @kernel(%arg0: i32, %arg1: memref<8x128xf32, #tpu.memory_space<vmem>>, %arg2: memref<8x1xi32, #tpu.memory_space<vmem>>, %arg3: memref<1x8x128xf32, #tpu.memory_space<vmem>>) attributes {dimension_semantics = [#tpu.dimension_semantics<parallel>], iteration_bounds = array<i64: 1>, scalar_prefetch = 0 : i64, scratch_operands = 0 : i64, tpu.core_type = #tpu.core_type<tc>, window_params = [{transform_indices = @transform_0, window_bounds = array<i64: 8, 128>}, {transform_indices = @transform_1, window_bounds = array<i64: 8, 1>}, {transform_indices = @transform_2, window_bounds = array<i64: 1, 8, 128>}]} {
    %c0 = arith.constant 0 : index
    %c0_0 = arith.constant 0 : index
    %0 = vector.load %arg1[%c0, %c0_0] : memref<8x128xf32, #tpu.memory_space<vmem>>, vector<8x128xf32>
    %c0_1 = arith.constant 0 : index
    %c0_2 = arith.constant 0 : index
    %1 = vector.load %arg2[%c0_1, %c0_2] : memref<8x1xi32, #tpu.memory_space<vmem>>, vector<8x1xi32>
    %cst = arith.constant dense<0xFF800000> : vector<8xf32>
    %2 = vector.multi_reduction <maximumf>, %0, %cst [1] : vector<8x128xf32> to vector<8xf32>
    %3 = vector.shape_cast %2 : vector<8xf32> to vector<8x1xf32>
    %4 = vector.broadcast %3 : vector<8x1xf32> to vector<8x128xf32>
    %5 = arith.subf %0, %4 : vector<8x128xf32>
    %6 = math.exp %5 : vector<8x128xf32>
    %cst_3 = arith.constant dense<0.000000e+00> : vector<8xf32>
    %7 = vector.multi_reduction <add>, %6, %cst_3 [1] : vector<8x128xf32> to vector<8xf32>
    %8 = vector.shape_cast %7 : vector<8xf32> to vector<8x1xf32>
    %9 = math.log %8 : vector<8x1xf32>
    %10 = vector.broadcast %9 : vector<8x1xf32> to vector<8x128xf32>
    %11 = arith.subf %5, %10 : vector<8x128xf32>
    %12 = tpu.iota {dimensions = array<i32: 1>} : vector<8x128xi32>
    %13 = vector.broadcast %1 : vector<8x1xi32> to vector<8x128xi32>
    %14 = arith.cmpi eq, %12, %13 : vector<8x128xi32>
    %cst_4 = arith.constant 0.000000e+00 : f32
    %15 = vector.broadcast %cst_4 : f32 to vector<8x128xf32>
    %16 = arith.select %14, %11, %15 : vector<8x128xi1>, vector<8x128xf32>
    %cst_5 = arith.constant dense<0.000000e+00> : vector<8xf32>
    %17 = vector.multi_reduction <add>, %16, %cst_5 [1] : vector<8x128xf32> to vector<8xf32>
    %18 = vector.shape_cast %17 : vector<8xf32> to vector<8x1xf32>
    %c10_i32 = arith.constant 10 : i32
    %19 = vector.broadcast %c10_i32 : i32 to vector<8x128xi32>
    %20 = arith.cmpi slt, %12, %19 : vector<8x128xi32>
    %cst_6 = arith.constant 0.000000e+00 : f32
    %21 = vector.broadcast %cst_6 : f32 to vector<8x128xf32>
    %22 = arith.select %20, %11, %21 : vector<8x128xi1>, vector<8x128xf32>
    %cst_7 = arith.constant dense<0.000000e+00> : vector<8xf32>
    %23 = vector.multi_reduction <add>, %22, %cst_7 [1] : vector<8x128xf32> to vector<8xf32>
    %24 = vector.shape_cast %23 : vector<8xf32> to vector<8x1xf32>
    %cst_8 = arith.constant 0.899999976 : f32
    %25 = vector.broadcast %cst_8 : f32 to vector<8x1xf32>
    %26 = arith.mulf %25, %18 : vector<8x1xf32>
    %cst_9 = arith.constant 0.00999999977 : f32
    %27 = vector.broadcast %cst_9 : f32 to vector<8x1xf32>
    %28 = arith.mulf %27, %24 : vector<8x1xf32>
    %29 = arith.addf %26, %28 : vector<8x1xf32>
    %cst_10 = arith.constant 0.000000e+00 : f32
    %30 = vector.broadcast %cst_10 : f32 to vector<8x1xf32>
    %31 = arith.subf %30, %29 : vector<8x1xf32>
    %32 = vector.shape_cast %31 : vector<8x1xf32> to vector<1x8x1xf32>
    %cst_11 = arith.constant dense<0.000000e+00> : vector<1xf32>
    %33 = vector.multi_reduction <add>, %32, %cst_11 [1, 2] : vector<1x8x1xf32> to vector<1xf32>
    %34 = vector.shape_cast %33 : vector<1xf32> to vector<1x1x1xf32>
    %35 = vector.extract %34[0, 0, 0] : f32 from vector<1x1x1xf32>
    %36 = vector.broadcast %35 : f32 to vector<1x8x128xf32>
    %c0_12 = arith.constant 0 : index
    %c0_13 = arith.constant 0 : index
    %c0_14 = arith.constant 0 : index
    %37 = vector.load %arg3[%c0_12, %c0_13, %c0_14] : memref<1x8x128xf32, #tpu.memory_space<vmem>>, vector<1x8x128xf32>
    tpu.vector_store %arg3[%c0_12, %c0_13, %c0_14], %36 {strides = array<i32>} : memref<1x8x128xf32, #tpu.memory_space<vmem>>, vector<1x8x128xf32>,
    return
  }
  func.func @transform_0(%arg0: i32) -> (i32, i32) {
    %c0_i32 = arith.constant 0 : i32
    %c0_i32_0 = arith.constant 0 : i32
    return %arg0, %c0_i32 : i32, i32
  }
  func.func @transform_1(%arg0: i32) -> (i32, i32) {
    %c0_i32 = arith.constant 0 : i32
    %c0_i32_0 = arith.constant 0 : i32
    return %arg0, %c0_i32 : i32, i32
  }
  func.func @transform_2(%arg0: i32) -> (i32, i32, i32) {
    %c0_i32 = arith.constant 0 : i32
    %c0_i32_0 = arith.constant 0 : i32
    %c0_i32_1 = arith.constant 0 : i32
    return %arg0, %c0_i32, %c0_i32_0 : i32, i32, i32
  }
}

</mosaic_0001>

<llo_original>
// kernel: label_smoothing_cross_entropy.1
$region0: #{label_smoothing_cross_entropy.1}
  #allocation0 [shape = 'u32[]', space=smem, size = 0x4, offset = 0x4, fixed_abs, tag = 'smem constant byte address 0x4 - core index']
  #allocation1 [shape = 'u32[144,128]{1,0:T(1,128)}', space=vmem, size = 0x12000, scoped, tag = 'internal scratch']
  %s0 = inlined_call_operand.vmem [shape: f32[8,128], index: 0, kind: input, shape index: {}]
  %s1 = inlined_call_operand.vmem [shape: s32[8,1], index: 1, kind: input, shape index: {}]
  %s2 = inlined_call_operand.vmem [shape: f32[1,8,128], index: 2, kind: output, shape index: {}]
  %s3 = sld [smem:[#allocation0]]
  $region18: #{label_smoothing_cross_entropy.1} parent=0
    _
  %s5 = ssub.s32 1, %s3
  %s6 = scalar_select 0, %s5, %s3
  // Predicated region
  $region2: #{label_smoothing_cross_entropy.1} parent=0 // pred_check
    _
  $region3: #{label_smoothing_cross_entropy.1} parent=0 // pred_check_branch
    %8 = sbr.rel (0) target = $region5
  $region4: #{label_smoothing_cross_entropy.1} parent=0 // pred_region
    _
  $region5: #{label_smoothing_cross_entropy.1} parent=0 // pred_fallthru
    _
  // Predicated region
  $region6: #{label_smoothing_cross_entropy.1} parent=0 // pred_check
    _
  $region7: #{label_smoothing_cross_entropy.1} parent=0 // pred_check_branch
    %10 = sbr.rel (0) target = $region9
  $region8: #{label_smoothing_cross_entropy.1} parent=0 // pred_region
    _
  $region9: #{label_smoothing_cross_entropy.1} parent=0 // pred_fallthru
    _
  %v11 = vld [vmem:[%s0] sm:$0xff]
  %v12 = vld [vmem:[%s1] sm:$0xff]
  %13 = vmax.xlane.f32.xlu0 %v11
  %v14 = vpop.xlane.xlu0 %13
  %v15 = vsub.f32 %v11, %v14
  %v16 = vmul.f32 %v15, 1.442695
  %v17 = vpow.pop %v16
  %18 = vadd.xlane.f32.xlu0 %v17
  %v19 = vpop.xlane.xlu0 %18
  %v20 = vlog2.pop %v19
  %v21 = vmul.f32 %v20, 0.6931472
  %v22 = vsub.f32 %v15, %v21
  %v23 = vlaneseq
  %v24 = vand.u32 %v23, 127
  %25 = vset.pattern.permute.xlu0 0
  %26 = vperm.xlu0 %25, %v12
  %v27 = vpop.permute.xlu0 %26
  %vm28 = vcmp.eq.s32.totalorder %v24, %v27
  %v29 = vsel %vm28, %v22, 0.0
  %30 = vadd.xlane.f32.xlu0 %v29
  %v31 = vpop.xlane.xlu0 %30
  %vm32 = vcmp.lt.s32.totalorder %v24, 10
  %v33 = vsel %vm32, %v22, 0.0
  %34 = vadd.xlane.f32.xlu0 %v33
  %v35 = vpop.xlane.xlu0 %34
  %v36 = vmul.f32 %v31, 0.9
  %v37 = vmul.f32 %v35, 0.01
  %v38 = vadd.f32 %v36, %v37
  %v39 = vsub.f32 0.0, %v38
  %vm40 = vcmask 7168
  %v41 = vsel %vm40, %v39, 0.0
  %42 = vadd.xlane.f32.xlu0 %v41
  %v43 = vpop.xlane.xlu0 %42
  %v44 = vrot.slane %v43, 4
  %v45 = vadd.f32 %v43, %v44
  %v46 = vrot.slane %v45, 2
  %v47 = vadd.f32 %v45, %v46
  %v48 = vrot.slane %v47, 1
  %v49 = vadd.f32 %v47, %v48
  %s50 = vtos %v49
  %v51 = vstv %s50
  %52 = vst [vmem:[%s2] sm:$0xff] %v51
  // Predicated region
  $region10: #{label_smoothing_cross_entropy.1} parent=0 // pred_check
    _
  $region11: #{label_smoothing_cross_entropy.1} parent=0 // pred_check_branch
    %54 = sbr.rel (0) target = $region13
  $region12: #{label_smoothing_cross_entropy.1} parent=0 // pred_region
    _
  $region13: #{label_smoothing_cross_entropy.1} parent=0 // pred_fallthru
    _
  // Predicated region
  $region14: #{label_smoothing_cross_entropy.1} parent=0 // pred_check
    _
  $region15: #{label_smoothing_cross_entropy.1} parent=0 // pred_check_branch
    %56 = sbr.rel (0) target = $region17
  $region16: #{label_smoothing_cross_entropy.1} parent=0 // pred_region
    _
  $region17: #{label_smoothing_cross_entropy.1} parent=0 // pred_fallthru
    _

</llo_original>
